<compile_context>
chip_gen: v6e
topology: v6e:2x2x1
jax: 0.10.0
libtpu: 0.0.40
codegen_flags: <defaults>
</compile_context>

<pallas_src>
import functools

import jax
import jax.numpy as jnp
from jax.experimental import pallas as pl
from jax.experimental.pallas import tpu as pltpu

IN_FEATURES = 28 * 28        # 784
HIDDEN = 100
HIDDEN_PAD = 128             # hidden padded to full lane width
OUT_PAD = 128                # logits padded to full lane width (lane-dense stores)
TM_MAX = 2048                # batch-tile rows (multiple of 16); ~13.7 MiB dbl-buffered
VMEM_LIMIT_BYTES = 32 * 1024 * 1024   # fits all of v5e/v6e/v7x physical VMEM


def _round_up(n, m):
    return ((n + m - 1) // m) * m


def mlp_mnist_kernel(x_ref, w1_ref, w2_ref, o_ref):
    # x_ref : (TM, 784)  f32    (batch tile of flattened images; cast in-kernel)
    # w1_ref: (784, 128) bf16   (fc1 weight, transposed + zero-padded, resident)
    # w2_ref: (128, 128) bf16   (fc2 weight, transposed + zero-padded, resident)
    # o_ref : (TM, 128)  bf16   (columns >= num_classes are exactly zero)
    xb = x_ref[...].astype(jnp.bfloat16)                      # VPU cast, hides under DMA
    h = jnp.dot(xb, w1_ref[...], preferred_element_type=jnp.float32)
    h = jnp.maximum(h, 0.0)                                   # ReLU in f32 on VPU
    y = jnp.dot(h.astype(jnp.bfloat16), w2_ref[...],
                preferred_element_type=jnp.float32)
    o_ref[...] = y.astype(o_ref.dtype)                        # bf16 writeback


def prepare_weights(w1, w2):
    """One-time conversion of PyTorch-layout weights (out, in) into the kernel's
    transposed, zero-padded bf16 layout.  Call once per checkpoint, NOT per forward."""
    num_classes = w2.shape[0]
    w1t = jnp.zeros((IN_FEATURES, HIDDEN_PAD), jnp.bfloat16)
    w1t = w1t.at[:, :HIDDEN].set(jnp.transpose(w1).astype(jnp.bfloat16))
    w2t = jnp.zeros((HIDDEN_PAD, OUT_PAD), jnp.bfloat16)
    w2t = w2t.at[:HIDDEN, :num_classes].set(jnp.transpose(w2).astype(jnp.bfloat16))
    return w1t, w2t


@functools.partial(jax.jit, static_argnames=("num_classes",))
def mlp_mnist_forward(x, w1t, w2t, num_classes=10):
    """x: (B, 1, 28, 28) or (B, 784) float32/bfloat16; w1t/w2t from prepare_weights().

    Returns bf16 logits of shape (B, num_classes).  Note: hidden activation and
    output are bf16 (f32 accumulation inside) — fine for MNIST inference/argmax,
    document if used for training losses that need f32 logits.
    """
    B = x.shape[0]
    x2d = x.reshape(B, IN_FEATURES)          # no dtype pre-cast: stream native dtype

    # Batch tiling; ragged last tile handled by Pallas edge-block clipping.
    tm = min(TM_MAX, _round_up(B, 16))
    grid = (pl.cdiv(B, tm),)

    cost = pl.CostEstimate(
        flops=2 * B * (IN_FEATURES * HIDDEN_PAD + HIDDEN_PAD * OUT_PAD),
        transcendentals=0,
        bytes_accessed=(x2d.size * x2d.dtype.itemsize
                        + w1t.size * 2 + w2t.size * 2
                        + B * OUT_PAD * 2),
    )

    out = pl.pallas_call(
        mlp_mnist_kernel,
        out_shape=jax.ShapeDtypeStruct((B, OUT_PAD), jnp.bfloat16),
        grid_spec=pltpu.PrefetchScalarGridSpec(
            num_scalar_prefetch=0,
            grid=grid,
            in_specs=[
                pl.BlockSpec((tm, IN_FEATURES), lambda i: (i, 0)),          # stream x
                pl.BlockSpec((IN_FEATURES, HIDDEN_PAD), lambda i: (0, 0)),  # resident W1t
                pl.BlockSpec((HIDDEN_PAD, OUT_PAD), lambda i: (0, 0)),      # resident W2t
            ],
            out_specs=pl.BlockSpec((tm, OUT_PAD), lambda i: (i, 0)),
        ),
        compiler_params=pltpu.CompilerParams(
            dimension_semantics=("parallel",),     # batch tiles independent (v7x 2 TCs)
            vmem_limit_bytes=VMEM_LIMIT_BYTES,
        ),
        cost_estimate=cost,
    )(x2d, w1t, w2t)

    # Column slice only (rows already exactly B thanks to the cdiv grid).  Callers
    # that can consume (B, OUT_PAD) padded logits directly should skip this slice.
    return out[:, :num_classes]


if __name__ == "__main__":
    key = jax.random.PRNGKey(0)
    k_x, k_w1, k_w2 = jax.random.split(key, 3)

    B = 2
    num_classes = 10
    # Deterministic "checkpoint": PyTorch-layout weights (out, in), bias=False.
    x = jax.random.normal(k_x, (B, 1, 28, 28), dtype=jnp.float32)
    w1 = jax.random.normal(k_w1, (HIDDEN, IN_FEATURES), dtype=jnp.float32) * 0.05
    w2 = jax.random.normal(k_w2, (num_classes, HIDDEN), dtype=jnp.float32) * 0.05

    w1t, w2t = prepare_weights(w1, w2)           # hoisted out of the forward path
    out = jax.block_until_ready(mlp_mnist_forward(x, w1t, w2t, num_classes=num_classes))
    assert out.shape == (B, num_classes)
    out_f32 = out.astype(jnp.float32)

    # bf16-consistent reference (same rounding points, f32 accumulation).
    x2d = x.reshape(B, IN_FEATURES).astype(jnp.bfloat16).astype(jnp.float32)
    w1f = w1.astype(jnp.bfloat16).astype(jnp.float32)
    w2f = w2.astype(jnp.bfloat16).astype(jnp.float32)
    h_ref = jnp.maximum(x2d @ w1f.T, 0.0)
    ref = (h_ref.astype(jnp.bfloat16).astype(jnp.float32) @ w2f.T)
    assert jnp.allclose(out_f32, ref, atol=5e-2, rtol=5e-2)

    # Sanity check vs full-f32 PyTorch semantics (looser: bf16 rounding everywhere).
    ref_f32 = jnp.maximum(x.reshape(B, IN_FEATURES) @ w1.T, 0.0) @ w2.T
    assert jnp.allclose(out_f32, ref_f32, atol=1.5e-1, rtol=1.5e-1)

    print("KERNEL_OK")
</pallas_src>

<mosaic_0001>
module attributes {stable_mosaic.version = 11 : i64} {
  func.func @mlp_mnist_kernel(%arg0: i32, %arg1: memref<16x784xf32, #tpu.memory_space<vmem>>, %arg2: memref<784x128xbf16, #tpu.memory_space<vmem>>, %arg3: memref<128x128xbf16, #tpu.memory_space<vmem>>, %arg4: memref<16x128xbf16, #tpu.memory_space<vmem>>) attributes {dimension_semantics = [#tpu.dimension_semantics<parallel>], iteration_bounds = array<i64: 1>, scalar_prefetch = 0 : i64, scratch_operands = 0 : i64, tpu.core_type = #tpu.core_type<tc>, window_params = [{transform_indices = @transform_0, window_bounds = array<i64: 16, 784>}, {pipeline_mode = #tpu.pipeline_mode<synchronous>, transform_indices = @transform_1, window_bounds = array<i64: 784, 128>}, {pipeline_mode = #tpu.pipeline_mode<synchronous>, transform_indices = @transform_2, window_bounds = array<i64: 128, 128>}, {transform_indices = @transform_3, window_bounds = array<i64: 16, 128>}]} {
    %c0 = arith.constant 0 : index
    %c0_0 = arith.constant 0 : index
    %0 = vector.load %arg1[%c0, %c0_0] : memref<16x784xf32, #tpu.memory_space<vmem>>, vector<16x784xf32>
    %1 = arith.truncf %0 : vector<16x784xf32> to vector<16x784xbf16>
    %c0_1 = arith.constant 0 : index
    %c0_2 = arith.constant 0 : index
    %2 = vector.load %arg2[%c0_1, %c0_2] : memref<784x128xbf16, #tpu.memory_space<vmem>>, vector<784x128xbf16>
    %cst = arith.constant dense<0.000000e+00> : vector<16x128xf32>
    %3 = tpu.matmul %1, %2, %cst {dimension_numbers = #tpu.dot_dimension_numbers<[1], [0], [0], [1], [0, 0, 1, 1], [], []>} : vector<16x784xbf16>, vector<784x128xbf16>, vector<16x128xf32> -> vector<16x128xf32>
    %cst_3 = arith.constant 0.000000e+00 : f32
    %4 = vector.broadcast %cst_3 : f32 to vector<16x128xf32>
    %5 = arith.maximumf %3, %4 : vector<16x128xf32>
    %6 = arith.truncf %5 : vector<16x128xf32> to vector<16x128xbf16>
    %c0_4 = arith.constant 0 : index
    %c0_5 = arith.constant 0 : index
    %7 = vector.load %arg3[%c0_4, %c0_5] : memref<128x128xbf16, #tpu.memory_space<vmem>>, vector<128x128xbf16>
    %cst_6 = arith.constant dense<0.000000e+00> : vector<16x128xf32>
    %8 = tpu.matmul %6, %7, %cst_6 {dimension_numbers = #tpu.dot_dimension_numbers<[1], [0], [0], [1], [0, 0, 1, 1], [], []>} : vector<16x128xbf16>, vector<128x128xbf16>, vector<16x128xf32> -> vector<16x128xf32>
    %9 = arith.truncf %8 : vector<16x128xf32> to vector<16x128xbf16>
    %c0_7 = arith.constant 0 : index
    %c0_8 = arith.constant 0 : index
    %10 = vector.load %arg4[%c0_7, %c0_8] : memref<16x128xbf16, #tpu.memory_space<vmem>>, vector<16x128xbf16>
    tpu.vector_store %arg4[%c0_7, %c0_8], %9 {strides = array<i32>} : memref<16x128xbf16, #tpu.memory_space<vmem>>, vector<16x128xbf16>,
    return
  }
  func.func @transform_0(%arg0: i32) -> (i32, i32) {
    %c0_i32 = arith.constant 0 : i32
    %c0_i32_0 = arith.constant 0 : i32
    return %arg0, %c0_i32 : i32, i32
  }
  func.func @transform_1(%arg0: i32) -> (i32, i32) {
    %c0_i32 = arith.constant 0 : i32
    %c0_i32_0 = arith.constant 0 : i32
    %c0_i32_1 = arith.constant 0 : i32
    return %c0_i32, %c0_i32_0 : i32, i32
  }
  func.func @transform_2(%arg0: i32) -> (i32, i32) {
    %c0_i32 = arith.constant 0 : i32
    %c0_i32_0 = arith.constant 0 : i32
    %c0_i32_1 = arith.constant 0 : i32
    return %c0_i32, %c0_i32_0 : i32, i32
  }
  func.func @transform_3(%arg0: i32) -> (i32, i32) {
    %c0_i32 = arith.constant 0 : i32
    %c0_i32_0 = arith.constant 0 : i32
    return %arg0, %c0_i32 : i32, i32
  }
}

</mosaic_0001>

<llo_original>
// kernel: mlp_mnist_forward.1
$region0: #{mlp_mnist_forward.1}
  #allocation0 [shape = 'u32[]', space=smem, size = 0x4, offset = 0x4, fixed_abs, tag = 'smem constant byte address 0x4 - core index']
  #allocation1 [shape = 'u32[144,128]{1,0:T(1,128)}', space=vmem, size = 0x12000, scoped, tag = 'internal scratch']
  %s0 = inlined_call_operand.vmem [shape: f32[2,784], index: 0, kind: input, shape index: {}]
  %s1 = inlined_call_operand.hbm [shape: bf16[784,128], index: 1, kind: input, shape index: {}]
  %s2 = inlined_call_operand.vmem [shape: bf16[128,128], index: 2, kind: input, shape index: {}]
  %s3 = inlined_call_operand.hbm [shape: bf16[2,128], index: 3, kind: output, shape index: {}]
  %s4 = sld [smem:[#allocation0]]
  $region26: #{mlp_mnist_forward.1} parent=0
    _
  %s6 = ssub.s32 1, %s4
  %s7 = scalar_select 0, %s6, %s4
  $region1: #{mlp_mnist_forward.1} parent=0
    #allocation2 [shape = 'u8[200704]{0}', space=vmem, size = 0x31000, scoped, tag = 'input window, operand 1, single buffered']
    #allocation3 [shape = 's32[1]{0}', space=sflag, size = 0x4, scoped, tag = 'scoped memory for mlp_mnist_forward.1']
    #allocation4 [shape = 's32[1]{0}', space=sflag, size = 0x4, scoped, tag = 'scoped memory for mlp_mnist_forward.1']
    #allocation5 [shape = 'u8[4096]{0}', space=vmem, size = 0x1000, scoped, tag = 'output window, operand 0, single buffered']
    %8 = vsyncpa [#allocation3], 0
    %9 = vsyncpa [#allocation4], 0
    // Predicated region
    $region2: #{mlp_mnist_forward.1} parent=1 // pred_check
      _
    $region3: #{mlp_mnist_forward.1} parent=1 // pred_check_branch
      %11 = sbr.rel (0) target = $region5
    $region4: #{mlp_mnist_forward.1} parent=1 // pred_region
      _
    $region5: #{mlp_mnist_forward.1} parent=1 // pred_fallthru
      _
    // Predicated region
    $region6: #{mlp_mnist_forward.1} parent=1 // pred_check
      _
    $region7: #{mlp_mnist_forward.1} parent=1 // pred_check_branch
      %13 = sbr.rel (0) target = $region9
    $region8: #{mlp_mnist_forward.1} parent=1 // pred_region
      %s15 = ssub.s32 6272, 6272
      %16 = vsyncadd [#allocation3], %s15
      %s17 = sshll.u32 [#allocation2], 4
      %s18 = int_to_ptr.vmem [resolvable:$true] %s17
      %23 = dma.hbm_to_vmem [thread:$0]  %s1, 6272, %s18, [#allocation3], 64, 64, 4
    $region9: #{mlp_mnist_forward.1} parent=1 // pred_fallthru
      _
    // Predicated region
    $region10: #{mlp_mnist_forward.1} parent=1 // pred_check
      _
    $region11: #{mlp_mnist_forward.1} parent=1 // pred_check_branch
      %25 = sbr.rel (0) target = $region13
    $region12: #{mlp_mnist_forward.1} parent=1 // pred_region
      _
    $region13: #{mlp_mnist_forward.1} parent=1 // pred_fallthru
      _
    // Predicated region
    $region14: #{mlp_mnist_forward.1} parent=1 // pred_check
      _
    $region15: #{mlp_mnist_forward.1} parent=1 // pred_check_branch
      %27 = sbr.rel (0) target = $region17
    $region16: #{mlp_mnist_forward.1} parent=1 // pred_region
      %28 = dma.done [#allocation3], 6272
    $region17: #{mlp_mnist_forward.1} parent=1 // pred_fallthru
      _
    %v30 = vld [vmem:[%s0] sm:$0xff]
    %v31 = vld [vmem:[%s0 + $0x8] sm:$0x3f]
    %v32 = vld [vmem:[%s0 + $0xe] sm:$0xff]
    %v33 = vld [vmem:[%s0 + $0x16] sm:$0x3f]
    %v34 = vld [vmem:[%s0 + $0x1c] sm:$0xff]
    %v35 = vld [vmem:[%s0 + $0x24] sm:$0x3f]
    %v36 = vld [vmem:[%s0 + $0x2a] sm:$0xff]
    %v37 = vld [vmem:[%s0 + $0x32] sm:$0x3f]
    %v38 = vld [vmem:[%s0 + $0x38] sm:$0xff]
    %v39 = vld [vmem:[%s0 + $0x40] sm:$0x3f]
    %v40 = vld [vmem:[%s0 + $0x46] sm:$0xff]
    %v41 = vld [vmem:[%s0 + $0x4e] sm:$0x3f]
    %v42 = vld [vmem:[%s0 + $0x54] sm:$0xff]
    %v43 = vld [vmem:[%s0 + $0x5c] sm:$0x3f]
    %v44 = vld [vmem:[%s0 + $0x62] sm:$0xff]
    %v45 = vld [vmem:[%s0 + $0x6a] sm:$0x3f]
    %v62 = vcombine.low %v30, %v32
    %v63 = vcombine.high %v30, %v32
    %v64 = vcombine.low %v34, %v36
    %v65 = vcombine.high %v34, %v36
    %v67 = vunpack.c.l.s4 1983009808
    %v68 = vunpack.c.0.s8 %v67
    %v69 = vlaneseq
    %v70 = vshrl.u32 %v69, 7
    %v71 = vsub.s32 %v68, %v70
    %v72 = vrot.slane %v62, %v71
    %v74 = vunpack.c.l.s4 1983009808
    %v75 = vunpack.c.0.s8 %v74
    %v76 = vlaneseq
    %v77 = vshrl.u32 %v76, 7
    %v78 = vsub.s32 %v75, %v77
    %v79 = vrot.slane %v63, %v78
    %v81 = vunpack.c.l.s4 1983009808
    %v82 = vunpack.c.0.s8 %v81
    %v83 = vlaneseq
    %v84 = vshrl.u32 %v83, 7
    %v85 = vsub.s32 %v82, %v84
    %v86 = vrot.slane %v64, %v85
    %v88 = vunpack.c.l.s4 1983009808
    %v89 = vunpack.c.0.s8 %v88
    %v90 = vlaneseq
    %v91 = vshrl.u32 %v90, 7
    %v92 = vsub.s32 %v89, %v91
    %v93 = vrot.slane %v65, %v92
    %v94 = vcombine.low %v72, %v86
    %v95 = vcombine.high %v72, %v86
    %v96 = vcombine.low %v79, %v93
    %v97 = vcombine.high %v79, %v93
    %v98 = vcombine.low %v31, %v33
    %v99 = vcombine.high %v31, %v33
    %v100 = vcombine.low %v35, %v37
    %v101 = vcombine.high %v35, %v37
    %v103 = vunpack.c.l.s4 1983009808
    %v104 = vunpack.c.0.s8 %v103
    %v105 = vlaneseq
    %v106 = vshrl.u32 %v105, 7
    %v107 = vsub.s32 %v104, %v106
    %v108 = vrot.slane %v98, %v107
    %v110 = vunpack.c.l.s4 1983009808
    %v111 = vunpack.c.0.s8 %v110
    %v112 = vlaneseq
    %v113 = vshrl.u32 %v112, 7
    %v114 = vsub.s32 %v111, %v113
    %v115 = vrot.slane %v99, %v114
    %v117 = vunpack.c.l.s4 1983009808
    %v118 = vunpack.c.0.s8 %v117
    %v119 = vlaneseq
    %v120 = vshrl.u32 %v119, 7
    %v121 = vsub.s32 %v118, %v120
    %v122 = vrot.slane %v100, %v121
    %v124 = vunpack.c.l.s4 1983009808
    %v125 = vunpack.c.0.s8 %v124
    %v126 = vlaneseq
    %v127 = vshrl.u32 %v126, 7
    %v128 = vsub.s32 %v125, %v127
    %v129 = vrot.slane %v101, %v128
    %v130 = vcombine.low %v108, %v122
    %v131 = vcombine.high %v108, %v122
    %v132 = vcombine.low %v115, %v129
    %v133 = vcombine.low %v38, %v40
    %v134 = vcombine.high %v38, %v40
    %v135 = vcombine.low %v42, %v44
    %v136 = vcombine.high %v42, %v44
    %v138 = vunpack.c.l.s4 1983009808
    %v139 = vunpack.c.0.s8 %v138
    %v140 = vlaneseq
    %v141 = vshrl.u32 %v140, 7
    %v142 = vsub.s32 %v139, %v141
    %v143 = vrot.slane %v133, %v142
    %v145 = vunpack.c.l.s4 1983009808
    %v146 = vunpack.c.0.s8 %v145
    %v147 = vlaneseq
    %v148 = vshrl.u32 %v147, 7
    %v149 = vsub.s32 %v146, %v148
    %v150 = vrot.slane %v134, %v149
    %v152 = vunpack.c.l.s4 1983009808
    %v153 = vunpack.c.0.s8 %v152
    %v154 = vlaneseq
    %v155 = vshrl.u32 %v154, 7
    %v156 = vsub.s32 %v153, %v155
    %v157 = vrot.slane %v135, %v156
    %v159 = vunpack.c.l.s4 1983009808
    %v160 = vunpack.c.0.s8 %v159
    %v161 = vlaneseq
    %v162 = vshrl.u32 %v161, 7
    %v163 = vsub.s32 %v160, %v162
    %v164 = vrot.slane %v136, %v163
    %v165 = vcombine.low %v143, %v157
    %v166 = vcombine.high %v143, %v157
    %v167 = vcombine.low %v150, %v164
    %v168 = vcombine.high %v150, %v164
    %v169 = vcombine.low %v39, %v41
    %v170 = vcombine.high %v39, %v41
    %v171 = vcombine.low %v43, %v45
    %v172 = vcombine.high %v43, %v45
    %v174 = vunpack.c.l.s4 1983009808
    %v175 = vunpack.c.0.s8 %v174
    %v176 = vlaneseq
    %v177 = vshrl.u32 %v176, 7
    %v178 = vsub.s32 %v175, %v177
    %v179 = vrot.slane %v169, %v178
    %v181 = vunpack.c.l.s4 1983009808
    %v182 = vunpack.c.0.s8 %v181
    %v183 = vlaneseq
    %v184 = vshrl.u32 %v183, 7
    %v185 = vsub.s32 %v182, %v184
    %v186 = vrot.slane %v170, %v185
    %v188 = vunpack.c.l.s4 1983009808
    %v189 = vunpack.c.0.s8 %v188
    %v190 = vlaneseq
    %v191 = vshrl.u32 %v190, 7
    %v192 = vsub.s32 %v189, %v191
    %v193 = vrot.slane %v171, %v192
    %v195 = vunpack.c.l.s4 1983009808
    %v196 = vunpack.c.0.s8 %v195
    %v197 = vlaneseq
    %v198 = vshrl.u32 %v197, 7
    %v199 = vsub.s32 %v196, %v198
    %v200 = vrot.slane %v172, %v199
    %v201 = vcombine.low %v179, %v193
    %v202 = vcombine.high %v179, %v193
    %v203 = vcombine.low %v186, %v200
    %v218 = vpack.c.bf16 %v165, %v94
    %v219 = vpack.c.bf16 %v166, %v95
    %v220 = vpack.c.bf16 %v167, %v96
    %v221 = vpack.c.bf16 %v168, %v97
    %v222 = vpack.c.bf16 %v201, %v130
    %v223 = vpack.c.bf16 %v202, %v131
    %v224 = vpack.c.bf16 %v203, %v132
    %v225 = vld [vmem:[#allocation2] sm:$0xf]
    %v226 = vld [vmem:[#allocation2 + $0x4] sm:$0xf]
    %v227 = vld [vmem:[#allocation2 + $0x8] sm:$0xf]
    %v228 = vld [vmem:[#allocation2 + $0xc] sm:$0xf]
    %v229 = vld [vmem:[#allocation2 + $0x10] sm:$0xf]
    %v230 = vld [vmem:[#allocation2 + $0x14] sm:$0xf]
    %v231 = vld [vmem:[#allocation2 + $0x18] sm:$0xf]
    %v232 = vld [vmem:[#allocation2 + $0x1c] sm:$0xf]
    %v233 = vld [vmem:[#allocation2 + $0x20] sm:$0xf]
    %v234 = vld [vmem:[#allocation2 + $0x24] sm:$0xf]
    %v235 = vld [vmem:[#allocation2 + $0x28] sm:$0xf]
    %v236 = vld [vmem:[#allocation2 + $0x2c] sm:$0xf]
    %v237 = vld [vmem:[#allocation2 + $0x30] sm:$0xf]
    %v238 = vld [vmem:[#allocation2 + $0x34] sm:$0xf]
    %v239 = vld [vmem:[#allocation2 + $0x38] sm:$0xf]
    %v240 = vld [vmem:[#allocation2 + $0x3c] sm:$0xf]
    %v241 = vld [vmem:[#allocation2 + $0x40] sm:$0xf]
    %v242 = vld [vmem:[#allocation2 + $0x44] sm:$0xf]
    %v243 = vld [vmem:[#allocation2 + $0x48] sm:$0xf]
    %v244 = vld [vmem:[#allocation2 + $0x4c] sm:$0xf]
    %v245 = vld [vmem:[#allocation2 + $0x50] sm:$0xf]
    %v246 = vld [vmem:[#allocation2 + $0x54] sm:$0xf]
    %v247 = vld [vmem:[#allocation2 + $0x58] sm:$0xf]
    %v248 = vld [vmem:[#allocation2 + $0x5c] sm:$0xf]
    %v249 = vld [vmem:[#allocation2 + $0x60] sm:$0xf]
    %v250 = vld [vmem:[#allocation2 + $0x64] sm:$0xf]
    %v251 = vld [vmem:[#allocation2 + $0x68] sm:$0xf]
    %v252 = vld [vmem:[#allocation2 + $0x6c] sm:$0xf]
    %v253 = vld [vmem:[#allocation2 + $0x70] sm:$0xf]
    %v254 = vld [vmem:[#allocation2 + $0x74] sm:$0xf]
    %v255 = vld [vmem:[#allocation2 + $0x78] sm:$0xf]
    %v256 = vld [vmem:[#allocation2 + $0x7c] sm:$0xf]
    %v257 = vld [vmem:[#allocation2 + $0x80] sm:$0xf]
    %v258 = vld [vmem:[#allocation2 + $0x84] sm:$0xf]
    %v259 = vld [vmem:[#allocation2 + $0x88] sm:$0xf]
    %v260 = vld [vmem:[#allocation2 + $0x8c] sm:$0xf]
    %v261 = vld [vmem:[#allocation2 + $0x90] sm:$0xf]
    %v262 = vld [vmem:[#allocation2 + $0x94] sm:$0xf]
    %v263 = vld [vmem:[#allocation2 + $0x98] sm:$0xf]
    %v264 = vld [vmem:[#allocation2 + $0x9c] sm:$0xf]
    %v265 = vld [vmem:[#allocation2 + $0xa0] sm:$0xf]
    %v266 = vld [vmem:[#allocation2 + $0xa4] sm:$0xf]
    %v267 = vld [vmem:[#allocation2 + $0xa8] sm:$0xf]
    %v268 = vld [vmem:[#allocation2 + $0xac] sm:$0xf]
    %v269 = vld [vmem:[#allocation2 + $0xb0] sm:$0xf]
    %v270 = vld [vmem:[#allocation2 + $0xb4] sm:$0xf]
    %v271 = vld [vmem:[#allocation2 + $0xb8] sm:$0xf]
    %v272 = vld [vmem:[#allocation2 + $0xbc] sm:$0xf]
    %v273 = vld [vmem:[#allocation2 + $0xc0] sm:$0xf]
    %v274 = vld [vmem:[#allocation2 + $0xc4] sm:$0xf]
    %v275 = vld [vmem:[#allocation2 + $0xc8] sm:$0xf]
    %v276 = vld [vmem:[#allocation2 + $0xcc] sm:$0xf]
    %v277 = vld [vmem:[#allocation2 + $0xd0] sm:$0xf]
    %v278 = vld [vmem:[#allocation2 + $0xd4] sm:$0xf]
    %v279 = vld [vmem:[#allocation2 + $0xd8] sm:$0xf]
    %v280 = vld [vmem:[#allocation2 + $0xdc] sm:$0xf]
    %v281 = vld [vmem:[#allocation2 + $0xe0] sm:$0xf]
    %v282 = vld [vmem:[#allocation2 + $0xe4] sm:$0xf]
    %v283 = vld [vmem:[#allocation2 + $0xe8] sm:$0xf]
    %v284 = vld [vmem:[#allocation2 + $0xec] sm:$0xf]
    %v285 = vld [vmem:[#allocation2 + $0xf0] sm:$0xf]
    %v286 = vld [vmem:[#allocation2 + $0xf4] sm:$0xf]
    %v287 = vld [vmem:[#allocation2 + $0xf8] sm:$0xf]
    %v288 = vld [vmem:[#allocation2 + $0xfc] sm:$0xf]
    %v289 = vld [vmem:[#allocation2 + $0x100] sm:$0xf]
    %v290 = vld [vmem:[#allocation2 + $0x104] sm:$0xf]
    %v291 = vld [vmem:[#allocation2 + $0x108] sm:$0xf]
    %v292 = vld [vmem:[#allocation2 + $0x10c] sm:$0xf]
    %v293 = vld [vmem:[#allocation2 + $0x110] sm:$0xf]
    %v294 = vld [vmem:[#allocation2 + $0x114] sm:$0xf]
    %v295 = vld [vmem:[#allocation2 + $0x118] sm:$0xf]
    %v296 = vld [vmem:[#allocation2 + $0x11c] sm:$0xf]
    %v297 = vld [vmem:[#allocation2 + $0x120] sm:$0xf]
    %v298 = vld [vmem:[#allocation2 + $0x124] sm:$0xf]
    %v299 = vld [vmem:[#allocation2 + $0x128] sm:$0xf]
    %v300 = vld [vmem:[#allocation2 + $0x12c] sm:$0xf]
    %v301 = vld [vmem:[#allocation2 + $0x130] sm:$0xf]
    %v302 = vld [vmem:[#allocation2 + $0x134] sm:$0xf]
    %v303 = vld [vmem:[#allocation2 + $0x138] sm:$0xf]
    %v304 = vld [vmem:[#allocation2 + $0x13c] sm:$0xf]
    %v305 = vld [vmem:[#allocation2 + $0x140] sm:$0xf]
    %v306 = vld [vmem:[#allocation2 + $0x144] sm:$0xf]
    %v307 = vld [vmem:[#allocation2 + $0x148] sm:$0xf]
    %v308 = vld [vmem:[#allocation2 + $0x14c] sm:$0xf]
    %v309 = vld [vmem:[#allocation2 + $0x150] sm:$0xf]
    %v310 = vld [vmem:[#allocation2 + $0x154] sm:$0xf]
    %v311 = vld [vmem:[#allocation2 + $0x158] sm:$0xf]
    %v312 = vld [vmem:[#allocation2 + $0x15c] sm:$0xf]
    %v313 = vld [vmem:[#allocation2 + $0x160] sm:$0xf]
    %v314 = vld [vmem:[#allocation2 + $0x164] sm:$0xf]
    %v315 = vld [vmem:[#allocation2 + $0x168] sm:$0xf]
    %v316 = vld [vmem:[#allocation2 + $0x16c] sm:$0xf]
    %v317 = vld [vmem:[#allocation2 + $0x170] sm:$0xf]
    %v318 = vld [vmem:[#allocation2 + $0x174] sm:$0xf]
    %v319 = vld [vmem:[#allocation2 + $0x178] sm:$0xf]
    %v320 = vld [vmem:[#allocation2 + $0x17c] sm:$0xf]
    %v321 = vld [vmem:[#allocation2 + $0x180] sm:$0xf]
    %v322 = vld [vmem:[#allocation2 + $0x184] sm:$0xf]
    %v421 = vunpack.c.l.b16 %v225
    %v422 = vunpack.c.l.b16 %v226
    %v423 = vunpack.c.l.b16 %v227
    %v424 = vunpack.c.l.b16 %v228
    %v425 = vunpack.c.l.b16 %v229
    %v426 = vunpack.c.l.b16 %v230
    %v427 = vunpack.c.l.b16 %v231
    %v428 = vunpack.c.l.b16 %v232
    %v429 = vunpack.c.l.b16 %v233
    %v430 = vunpack.c.l.b16 %v234
    %v431 = vunpack.c.l.b16 %v235
    %v432 = vunpack.c.l.b16 %v236
    %v433 = vunpack.c.l.b16 %v237
    %v434 = vunpack.c.l.b16 %v238
    %v435 = vunpack.c.l.b16 %v239
    %v436 = vunpack.c.l.b16 %v240
    %v437 = vunpack.c.l.b16 %v241
    %v438 = vunpack.c.l.b16 %v242
    %v439 = vunpack.c.l.b16 %v243
    %v440 = vunpack.c.l.b16 %v244
    %v441 = vunpack.c.l.b16 %v245
    %v442 = vunpack.c.l.b16 %v246
    %v443 = vunpack.c.l.b16 %v247
    %v444 = vunpack.c.l.b16 %v248
    %v445 = vunpack.c.l.b16 %v249
    %v446 = vunpack.c.l.b16 %v250
    %v447 = vunpack.c.l.b16 %v251
    %v448 = vunpack.c.l.b16 %v252
    %v449 = vunpack.c.l.b16 %v253
    %v450 = vunpack.c.l.b16 %v254
    %v451 = vunpack.c.l.b16 %v255
    %v452 = vunpack.c.l.b16 %v256
    %v453 = vunpack.c.l.b16 %v257
    %v454 = vunpack.c.l.b16 %v258
    %v455 = vunpack.c.l.b16 %v259
    %v456 = vunpack.c.l.b16 %v260
    %v457 = vunpack.c.l.b16 %v261
    %v458 = vunpack.c.l.b16 %v262
    %v459 = vunpack.c.l.b16 %v263
    %v460 = vunpack.c.l.b16 %v264
    %v461 = vunpack.c.l.b16 %v265
    %v462 = vunpack.c.l.b16 %v266
    %v463 = vunpack.c.l.b16 %v267
    %v464 = vunpack.c.l.b16 %v268
    %v465 = vunpack.c.l.b16 %v269
    %v466 = vunpack.c.l.b16 %v270
    %v467 = vunpack.c.l.b16 %v271
    %v468 = vunpack.c.l.b16 %v272
    %v469 = vunpack.c.l.b16 %v273
    %v470 = vunpack.c.l.b16 %v274
    %v471 = vunpack.c.l.b16 %v275
    %v472 = vunpack.c.l.b16 %v276
    %v473 = vunpack.c.l.b16 %v277
    %v474 = vunpack.c.l.b16 %v278
    %v475 = vunpack.c.l.b16 %v279
    %v476 = vunpack.c.l.b16 %v280
    %v477 = vunpack.c.l.b16 %v281
    %v478 = vunpack.c.l.b16 %v282
    %v479 = vunpack.c.l.b16 %v283
    %v480 = vunpack.c.l.b16 %v284
    %v481 = vunpack.c.l.b16 %v285
    %v482 = vunpack.c.l.b16 %v286
    %v483 = vunpack.c.l.b16 %v287
    %v484 = vunpack.c.l.b16 %v288
    %v485 = vunpack.c.l.b16 %v289
    %v486 = vunpack.c.l.b16 %v290
    %v487 = vunpack.c.l.b16 %v291
    %v488 = vunpack.c.l.b16 %v292
    %v489 = vunpack.c.l.b16 %v293
    %v490 = vunpack.c.l.b16 %v294
    %v491 = vunpack.c.l.b16 %v295
    %v492 = vunpack.c.l.b16 %v296
    %v493 = vunpack.c.l.b16 %v297
    %v494 = vunpack.c.l.b16 %v298
    %v495 = vunpack.c.l.b16 %v299
    %v496 = vunpack.c.l.b16 %v300
    %v497 = vunpack.c.l.b16 %v301
    %v498 = vunpack.c.l.b16 %v302
    %v499 = vunpack.c.l.b16 %v303
    %v500 = vunpack.c.l.b16 %v304
    %v501 = vunpack.c.l.b16 %v305
    %v502 = vunpack.c.l.b16 %v306
    %v503 = vunpack.c.l.b16 %v307
    %v504 = vunpack.c.l.b16 %v308
    %v505 = vunpack.c.l.b16 %v309
    %v506 = vunpack.c.l.b16 %v310
    %v507 = vunpack.c.l.b16 %v311
    %v508 = vunpack.c.l.b16 %v312
    %v509 = vunpack.c.l.b16 %v313
    %v510 = vunpack.c.l.b16 %v314
    %v511 = vunpack.c.l.b16 %v315
    %v512 = vunpack.c.l.b16 %v316
    %v513 = vunpack.c.l.b16 %v317
    %v514 = vunpack.c.l.b16 %v318
    %v515 = vunpack.c.l.b16 %v319
    %v516 = vunpack.c.l.b16 %v320
    %v517 = vunpack.c.l.b16 %v321
    %v518 = vunpack.c.l.b16 %v322
    %v519 = vpack.c.b16 %v422, %v421
    %v520 = vpack.c.b16 %v424, %v423
    %v521 = vpack.c.b16 %v426, %v425
    %v522 = vpack.c.b16 %v428, %v427
    %v523 = vpack.c.b16 %v430, %v429
    %v524 = vpack.c.b16 %v432, %v431
    %v525 = vpack.c.b16 %v434, %v433
    %v526 = vpack.c.b16 %v436, %v435
    %v527 = vpack.c.b16 %v438, %v437
    %v528 = vpack.c.b16 %v440, %v439
    %v529 = vpack.c.b16 %v442, %v441
    %v530 = vpack.c.b16 %v444, %v443
    %v531 = vpack.c.b16 %v446, %v445
    %v532 = vpack.c.b16 %v448, %v447
    %v533 = vpack.c.b16 %v450, %v449
    %v534 = vpack.c.b16 %v452, %v451
    %v535 = vpack.c.b16 %v454, %v453
    %v536 = vpack.c.b16 %v456, %v455
    %v537 = vpack.c.b16 %v458, %v457
    %v538 = vpack.c.b16 %v460, %v459
    %v539 = vpack.c.b16 %v462, %v461
    %v540 = vpack.c.b16 %v464, %v463
    %v541 = vpack.c.b16 %v466, %v465
    %v542 = vpack.c.b16 %v468, %v467
    %v543 = vpack.c.b16 %v470, %v469
    %v544 = vpack.c.b16 %v472, %v471
    %v545 = vpack.c.b16 %v474, %v473
    %v546 = vpack.c.b16 %v476, %v475
    %v547 = vpack.c.b16 %v478, %v477
    %v548 = vpack.c.b16 %v480, %v479
    %v549 = vpack.c.b16 %v482, %v481
    %v550 = vpack.c.b16 %v484, %v483
    %v551 = vpack.c.b16 %v486, %v485
    %v552 = vpack.c.b16 %v488, %v487
    %v553 = vpack.c.b16 %v490, %v489
    %v554 = vpack.c.b16 %v492, %v491
    %v555 = vpack.c.b16 %v494, %v493
    %v556 = vpack.c.b16 %v496, %v495
    %v557 = vpack.c.b16 %v498, %v497
    %v558 = vpack.c.b16 %v500, %v499
    %v559 = vpack.c.b16 %v502, %v501
    %v560 = vpack.c.b16 %v504, %v503
    %v561 = vpack.c.b16 %v506, %v505
    %v562 = vpack.c.b16 %v508, %v507
    %v563 = vpack.c.b16 %v510, %v509
    %v564 = vpack.c.b16 %v512, %v511
    %v565 = vpack.c.b16 %v514, %v513
    %v566 = vpack.c.b16 %v516, %v515
    %v567 = vpack.c.b16 %v518, %v517
    %vm617 = vcmask 130048
    %v619 = vsel %vm617, %v224, 0
    %621 = vmatprep.subr.bf16.mxu0 0
    %622 = vmatpush1.bf16.msra.mxu0 %v526
    %623 = vmatprep.subr.bf16.mxu0 0
    %624 = vmatpush1.bf16.msra.mxu0 %v525
    %625 = vmatprep.subr.bf16.mxu0 0
    %626 = vmatpush1.bf16.msra.mxu0 %v524
    %627 = vmatprep.subr.bf16.mxu0 0
    %628 = vmatpush1.bf16.msra.mxu0 %v523
    %629 = vmatprep.subr.bf16.mxu0 0
    %630 = vmatpush1.bf16.msra.mxu0 %v522
    %631 = vmatprep.subr.bf16.mxu0 0
    %632 = vmatpush1.bf16.msra.mxu0 %v521
    %633 = vmatprep.subr.bf16.mxu0 0
    %634 = vmatpush1.bf16.msra.mxu0 %v520
    %635 = vmatprep.subr.bf16.mxu0 0
    %636 = vmatpush1.bf16.msra.mxu0 %v519
    %637 = vmatprep.subr.bf16.mxu0 0
    %638 = vmatpush2.bf16.msra.mxu0 %v534
    %639 = vmatprep.subr.bf16.mxu0 0
    %640 = vmatpush2.bf16.msra.mxu0 %v533
    %641 = vmatprep.subr.bf16.mxu0 0
    %642 = vmatpush2.bf16.msra.mxu0 %v532
    %643 = vmatprep.subr.bf16.mxu0 0
    %644 = vmatpush2.bf16.msra.mxu0 %v531
    %645 = vmatprep.subr.bf16.mxu0 0
    %646 = vmatpush2.bf16.msra.mxu0 %v530
    %647 = vmatprep.subr.bf16.mxu0 0
    %648 = vmatpush2.bf16.msra.mxu0 %v529
    %649 = vmatprep.subr.bf16.mxu0 0
    %650 = vmatpush2.bf16.msra.mxu0 %v528
    %651 = vmatprep.subr.bf16.mxu0 0
    %652 = vmatpush2.bf16.msra.mxu0 %v527
    %653 = vmatprep.mubr.bf16.mxu0 %v219
    %654 = vmatmul.mubr.bf16.gmra.mxu0 %v218
    %v655 = vpop.f32.mrf.mxu0
    %v656 = vadd.f32 0.0, %v655
    %v657 = vpop.f32.mrf.mxu0
    %v658 = vpop.f32.mrf.mxu0
    %v659 = vadd.f32 0.0, %v658
    %v660 = vpop.f32.mrf.mxu0
    %661 = vdwg.mxu0
    %662 = vmatprep.subr.bf16.mxu0 0
    %663 = vmatpush1.bf16.msra.mxu0 %v542
    %664 = vmatprep.subr.bf16.mxu0 0
    %665 = vmatpush1.bf16.msra.mxu0 %v541
    %666 = vmatprep.subr.bf16.mxu0 0
    %667 = vmatpush1.bf16.msra.mxu0 %v540
    %668 = vmatprep.subr.bf16.mxu0 0
    %669 = vmatpush1.bf16.msra.mxu0 %v539
    %670 = vmatprep.subr.bf16.mxu0 0
    %671 = vmatpush1.bf16.msra.mxu0 %v538
    %672 = vmatprep.subr.bf16.mxu0 0
    %673 = vmatpush1.bf16.msra.mxu0 %v537
    %674 = vmatprep.subr.bf16.mxu0 0
    %675 = vmatpush1.bf16.msra.mxu0 %v536
    %676 = vmatprep.subr.bf16.mxu0 0
    %677 = vmatpush1.bf16.msra.mxu0 %v535
    %678 = vmatprep.subr.bf16.mxu0 0
    %679 = vmatpush2.bf16.msra.mxu0 %v550
    %680 = vmatprep.subr.bf16.mxu0 0
    %681 = vmatpush2.bf16.msra.mxu0 %v549
    %682 = vmatprep.subr.bf16.mxu0 0
    %683 = vmatpush2.bf16.msra.mxu0 %v548
    %684 = vmatprep.subr.bf16.mxu0 0
    %685 = vmatpush2.bf16.msra.mxu0 %v547
    %686 = vmatprep.subr.bf16.mxu0 0
    %687 = vmatpush2.bf16.msra.mxu0 %v546
    %688 = vmatprep.subr.bf16.mxu0 0
    %689 = vmatpush2.bf16.msra.mxu0 %v545
    %690 = vmatprep.subr.bf16.mxu0 0
    %691 = vmatpush2.bf16.msra.mxu0 %v544
    %692 = vmatprep.subr.bf16.mxu0 0
    %693 = vmatpush2.bf16.msra.mxu0 %v543
    %694 = vmatprep.mubr.bf16.mxu0 %v221
    %695 = vmatmul.mubr.bf16.gmra.mxu0 %v220
    %v696 = vpop.f32.mrf.mxu0
    %v697 = vadd.f32 %v656, %v696
    %v698 = vpop.f32.mrf.mxu0
    %v699 = vpop.f32.mrf.mxu0
    %v700 = vadd.f32 %v659, %v699
    %v701 = vpop.f32.mrf.mxu0
    %702 = vdwg.mxu0
    %703 = vmatprep.subr.bf16.mxu0 0
    %704 = vmatpush1.bf16.msra.mxu0 %v558
    %705 = vmatprep.subr.bf16.mxu0 0
    %706 = vmatpush1.bf16.msra.mxu0 %v557
    %707 = vmatprep.subr.bf16.mxu0 0
    %708 = vmatpush1.bf16.msra.mxu0 %v556
    %709 = vmatprep.subr.bf16.mxu0 0
    %710 = vmatpush1.bf16.msra.mxu0 %v555
    %711 = vmatprep.subr.bf16.mxu0 0
    %712 = vmatpush1.bf16.msra.mxu0 %v554
    %713 = vmatprep.subr.bf16.mxu0 0
    %714 = vmatpush1.bf16.msra.mxu0 %v553
    %715 = vmatprep.subr.bf16.mxu0 0
    %716 = vmatpush1.bf16.msra.mxu0 %v552
    %717 = vmatprep.subr.bf16.mxu0 0
    %718 = vmatpush1.bf16.msra.mxu0 %v551
    %719 = vmatprep.subr.bf16.mxu0 0
    %720 = vmatpush2.bf16.msra.mxu0 %v566
    %721 = vmatprep.subr.bf16.mxu0 0
    %722 = vmatpush2.bf16.msra.mxu0 %v565
    %723 = vmatprep.subr.bf16.mxu0 0
    %724 = vmatpush2.bf16.msra.mxu0 %v564
    %725 = vmatprep.subr.bf16.mxu0 0
    %726 = vmatpush2.bf16.msra.mxu0 %v563
    %727 = vmatprep.subr.bf16.mxu0 0
    %728 = vmatpush2.bf16.msra.mxu0 %v562
    %729 = vmatprep.subr.bf16.mxu0 0
    %730 = vmatpush2.bf16.msra.mxu0 %v561
    %731 = vmatprep.subr.bf16.mxu0 0
    %732 = vmatpush2.bf16.msra.mxu0 %v560
    %733 = vmatprep.subr.bf16.mxu0 0
    %734 = vmatpush2.bf16.msra.mxu0 %v559
    %735 = vmatprep.mubr.bf16.mxu0 %v223
    %736 = vmatmul.mubr.bf16.gmra.mxu0 %v222
    %v737 = vpop.f32.mrf.mxu0
    %v738 = vadd.f32 %v697, %v737
    %v739 = vpop.f32.mrf.mxu0
    %v740 = vpop.f32.mrf.mxu0
    %v741 = vadd.f32 %v700, %v740
    %v742 = vpop.f32.mrf.mxu0
    %743 = vdwg.mxu0
    %744 = vmatprep.subr.bf16.mxu0 0
    %745 = vmatpush1.bf16.msra.mxu0 0
    %746 = vmatprep.subr.bf16.mxu0 0
    %747 = vmatpush1.bf16.msra.mxu0 0
    %748 = vmatprep.subr.bf16.mxu0 0
    %749 = vmatpush1.bf16.msra.mxu0 0
    %750 = vmatprep.subr.bf16.mxu0 0
    %751 = vmatpush1.bf16.msra.mxu0 0
    %752 = vmatprep.subr.bf16.mxu0 0
    %753 = vmatpush1.bf16.msra.mxu0 0
    %754 = vmatprep.subr.bf16.mxu0 0
    %755 = vmatpush1.bf16.msra.mxu0 0
    %756 = vmatprep.subr.bf16.mxu0 0
    %757 = vmatpush1.bf16.msra.mxu0 0
    %758 = vmatprep.subr.bf16.mxu0 0
    %759 = vmatpush1.bf16.msra.mxu0 %v567
    %760 = vmatprep.subr.bf16.mxu0 0
    %761 = vmatpush2.bf16.msra.mxu0 0
    %762 = vmatprep.subr.bf16.mxu0 0
    %763 = vmatpush2.bf16.msra.mxu0 0
    %764 = vmatprep.subr.bf16.mxu0 0
    %765 = vmatpush2.bf16.msra.mxu0 0
    %766 = vmatprep.subr.bf16.mxu0 0
    %767 = vmatpush2.bf16.msra.mxu0 0
    %768 = vmatprep.subr.bf16.mxu0 0
    %769 = vmatpush2.bf16.msra.mxu0 0
    %770 = vmatprep.subr.bf16.mxu0 0
    %771 = vmatpush2.bf16.msra.mxu0 0
    %772 = vmatprep.subr.bf16.mxu0 0
    %773 = vmatpush2.bf16.msra.mxu0 0
    %774 = vmatprep.subr.bf16.mxu0 0
    %775 = vmatpush2.bf16.msra.mxu0 0
    %776 = vmatprep.mubr.bf16.mxu0 0
    %777 = vmatmul.mubr.bf16.gmra.mxu0 %v619
    %v778 = vpop.f32.mrf.mxu0
    %v779 = vadd.f32 %v738, %v778
    %v780 = vpop.f32.mrf.mxu0
    %v781 = vpop.f32.mrf.mxu0
    %v782 = vadd.f32 %v741, %v781
    %v783 = vpop.f32.mrf.mxu0
    %784 = vdwg.mxu0
    %v785 = vmax.f32 %v779, 0.0
    %v786 = vmax.f32 %v782, 0.0
    %v787 = vpack.c.bf16 %v786, %v785
    %v788 = vld [vmem:[%s2] sm:$0xf]
    %v789 = vld [vmem:[%s2 + $0x4] sm:$0xf]
    %v790 = vld [vmem:[%s2 + $0x8] sm:$0xf]
    %v791 = vld [vmem:[%s2 + $0xc] sm:$0xf]
    %v792 = vld [vmem:[%s2 + $0x10] sm:$0xf]
    %v793 = vld [vmem:[%s2 + $0x14] sm:$0xf]
    %v794 = vld [vmem:[%s2 + $0x18] sm:$0xf]
    %v795 = vld [vmem:[%s2 + $0x1c] sm:$0xf]
    %v796 = vld [vmem:[%s2 + $0x20] sm:$0xf]
    %v797 = vld [vmem:[%s2 + $0x24] sm:$0xf]
    %v798 = vld [vmem:[%s2 + $0x28] sm:$0xf]
    %v799 = vld [vmem:[%s2 + $0x2c] sm:$0xf]
    %v800 = vld [vmem:[%s2 + $0x30] sm:$0xf]
    %v801 = vld [vmem:[%s2 + $0x34] sm:$0xf]
    %v802 = vld [vmem:[%s2 + $0x38] sm:$0xf]
    %v803 = vld [vmem:[%s2 + $0x3c] sm:$0xf]
    %v820 = vunpack.c.l.b16 %v788
    %v821 = vunpack.c.l.b16 %v789
    %v822 = vunpack.c.l.b16 %v790
    %v823 = vunpack.c.l.b16 %v791
    %v824 = vunpack.c.l.b16 %v792
    %v825 = vunpack.c.l.b16 %v793
    %v826 = vunpack.c.l.b16 %v794
    %v827 = vunpack.c.l.b16 %v795
    %v828 = vunpack.c.l.b16 %v796
    %v829 = vunpack.c.l.b16 %v797
    %v830 = vunpack.c.l.b16 %v798
    %v831 = vunpack.c.l.b16 %v799
    %v832 = vunpack.c.l.b16 %v800
    %v833 = vunpack.c.l.b16 %v801
    %v834 = vunpack.c.l.b16 %v802
    %v835 = vunpack.c.l.b16 %v803
    %v836 = vpack.c.b16 %v821, %v820
    %v837 = vpack.c.b16 %v823, %v822
    %v838 = vpack.c.b16 %v825, %v824
    %v839 = vpack.c.b16 %v827, %v826
    %v840 = vpack.c.b16 %v829, %v828
    %v841 = vpack.c.b16 %v831, %v830
    %v842 = vpack.c.b16 %v833, %v832
    %v843 = vpack.c.b16 %v835, %v834
    %852 = vmatprep.subr.bf16.mxu0 0
    %853 = vmatpush1.bf16.msra.mxu0 %v843
    %854 = vmatprep.subr.bf16.mxu0 0
    %855 = vmatpush1.bf16.msra.mxu0 %v842
    %856 = vmatprep.subr.bf16.mxu0 0
    %857 = vmatpush1.bf16.msra.mxu0 %v841
    %858 = vmatprep.subr.bf16.mxu0 0
    %859 = vmatpush1.bf16.msra.mxu0 %v840
    %860 = vmatprep.subr.bf16.mxu0 0
    %861 = vmatpush1.bf16.msra.mxu0 %v839
    %862 = vmatprep.subr.bf16.mxu0 0
    %863 = vmatpush1.bf16.msra.mxu0 %v838
    %864 = vmatprep.subr.bf16.mxu0 0
    %865 = vmatpush1.bf16.msra.mxu0 %v837
    %866 = vmatprep.subr.bf16.mxu0 0
    %867 = vmatpush1.bf16.msra.mxu0 %v836
    %868 = vmatprep.subr.bf16.mxu0 0
    %869 = vmatpush2.bf16.msra.mxu0 0
    %870 = vmatprep.subr.bf16.mxu0 0
    %871 = vmatpush2.bf16.msra.mxu0 0
    %872 = vmatprep.subr.bf16.mxu0 0
    %873 = vmatpush2.bf16.msra.mxu0 0
    %874 = vmatprep.subr.bf16.mxu0 0
    %875 = vmatpush2.bf16.msra.mxu0 0
    %876 = vmatprep.subr.bf16.mxu0 0
    %877 = vmatpush2.bf16.msra.mxu0 0
    %878 = vmatprep.subr.bf16.mxu0 0
    %879 = vmatpush2.bf16.msra.mxu0 0
    %880 = vmatprep.subr.bf16.mxu0 0
    %881 = vmatpush2.bf16.msra.mxu0 0
    %882 = vmatprep.subr.bf16.mxu0 0
    %883 = vmatpush2.bf16.msra.mxu0 0
    %884 = vmatprep.mubr.bf16.mxu0 0
    %885 = vmatmul.mubr.bf16.gmra.mxu0 %v787
    %v886 = vpop.f32.mrf.mxu0
    %v887 = vadd.f32 0.0, %v886
    %v888 = vpop.f32.mrf.mxu0
    %v889 = vpop.f32.mrf.mxu0
    %v890 = vadd.f32 0.0, %v889
    %v891 = vpop.f32.mrf.mxu0
    %892 = vdwg.mxu0
    %v893 = vpack.c.bf16 %v890, %v887
    %v895 = vcombine.high %v893, %v893
    %v897 = vunpack.c.l.s4 1966171168
    %v898 = vunpack.c.0.s8 %v897
    %v899 = vlaneseq
    %v900 = vshrl.u32 %v899, 7
    %v901 = vsub.s32 %v898, %v900
    %v902 = vrot.slane %v893, %v901
    %v904 = vunpack.c.l.s4 1966171168
    %v905 = vunpack.c.0.s8 %v904
    %v906 = vlaneseq
    %v907 = vshrl.u32 %v906, 7
    %v908 = vsub.s32 %v905, %v907
    %v909 = vrot.slane %v895, %v908
    %v910 = vcombine.high %v902, %v902
    %v911 = vcombine.high %v909, %v909
    %v913 = vunpack.c.l.s4 1966171168
    %v914 = vunpack.c.0.s8 %v913
    %v915 = vlaneseq
    %v916 = vshrl.u32 %v915, 7
    %v917 = vsub.s32 %v914, %v916
    %v918 = vrot.slane %v902, %v917
    %v920 = vunpack.c.l.s4 1966171168
    %v921 = vunpack.c.0.s8 %v920
    %v922 = vlaneseq
    %v923 = vshrl.u32 %v922, 7
    %v924 = vsub.s32 %v921, %v923
    %v925 = vrot.slane %v909, %v924
    %v927 = vunpack.c.l.s4 1966171168
    %v928 = vunpack.c.0.s8 %v927
    %v929 = vlaneseq
    %v930 = vshrl.u32 %v929, 7
    %v931 = vsub.s32 %v928, %v930
    %v932 = vrot.slane %v910, %v931
    %v934 = vunpack.c.l.s4 1966171168
    %v935 = vunpack.c.0.s8 %v934
    %v936 = vlaneseq
    %v937 = vshrl.u32 %v936, 7
    %v938 = vsub.s32 %v935, %v937
    %v939 = vrot.slane %v911, %v938
    %v940 = vcombine.high %v918, %v918
    %v941 = vcombine.high %v925, %v925
    %v942 = vcombine.high %v932, %v932
    %v943 = vcombine.high %v939, %v939
    %952 = vst [vmem:[#allocation5] sm:$0x1] %v918
    %953 = vst [vmem:[#allocation5 + $0x1] sm:$0x1] %v932
    %954 = vst [vmem:[#allocation5 + $0x2] sm:$0x1] %v940
    %955 = vst [vmem:[#allocation5 + $0x3] sm:$0x1] %v942
    %956 = vst [vmem:[#allocation5 + $0x4] sm:$0x1] %v925
    %957 = vst [vmem:[#allocation5 + $0x5] sm:$0x1] %v939
    %958 = vst [vmem:[#allocation5 + $0x6] sm:$0x1] %v941
    %959 = vst [vmem:[#allocation5 + $0x7] sm:$0x1] %v943
    // Predicated region
    $region18: #{mlp_mnist_forward.1} parent=1 // pred_check
      _
    $region19: #{mlp_mnist_forward.1} parent=1 // pred_check_branch
      %961 = sbr.rel (0) target = $region21
    $region20: #{mlp_mnist_forward.1} parent=1 // pred_region
      %s963 = ssub.s32 128, 16
      %964 = vsyncadd [#allocation4], %s963
      %s965 = sshll.u32 [#allocation5], 4
      %s966 = int_to_ptr.vmem [resolvable:$true] %s965
      %971 = dma.vmem_to_hbm [thread:$0]  %s966, 16, %s3, [#allocation4], 16, 16, 1
    $region21: #{mlp_mnist_forward.1} parent=1 // pred_fallthru
      _
    // Predicated region
    $region22: #{mlp_mnist_forward.1} parent=1 // pred_check
      _
    $region23: #{mlp_mnist_forward.1} parent=1 // pred_check_branch
      %973 = sbr.rel (0) target = $region25
    $region24: #{mlp_mnist_forward.1} parent=1 // pred_region
      %974 = dma.done [#allocation4], 128
    $region25: #{mlp_mnist_forward.1} parent=1 // pred_fallthru
      _
    %975 = vsyncpa [#allocation3], 1
    %976 = vsyncpa [#allocation4], 1

</llo_original>
